<compile_context>
chip_gen: v6e
topology: v6e:2x2x1
jax: 0.10.0
libtpu: 0.0.40
codegen_flags: <defaults>
</compile_context>

<pallas_src>
import jax
import jax.numpy as jnp
from jax.experimental import pallas as pl
from jax.experimental.pallas import tpu as pltpu

IN_FEATURES = 9
HIDDEN = 128
N_HEADS = 3
H_ALL = HIDDEN * N_HEADS          # 384
MAX_TB = 4096                     # batch tile (lanes) for large B


def mlp_kernel(xT_ref, w1T_ref, b1T_ref, w2T_ref, b2T_ref, oT_ref):
    # xT_ref:  (9, tb) f32      w1T_ref: (384, 9) bf16   b1T_ref: (384, 1) f32
    # w2T_ref: (3, 384) bf16    b2T_ref: (3, 1) f32      oT_ref:  (3, tb) f32
    xT = xT_ref[...].astype(jnp.bfloat16)

    # Layer 1 for all three heads: one bf16 MXU matmul, f32 accumulation.
    h = jnp.dot(w1T_ref[...], xT, preferred_element_type=jnp.float32)   # (384, tb)
    h = jnp.maximum(h + b1T_ref[...], 0.0)                              # VPU

    # Layer 2: size-3 dim is the M dim -> ~tb/128 MXU pushes (near free).
    o = jnp.dot(w2T_ref[...], h.astype(jnp.bfloat16),
                preferred_element_type=jnp.float32)                     # (3, tb)

    # Single lane-dense store of the whole (3, tb) tile.
    oT_ref[...] = (o + b2T_ref[...]).astype(oT_ref.dtype)


def _pick_tile(batch):
    """Lane tile: full B for small batches, else a multiple of 128 giving >=2 steps."""
    if batch <= 128:
        return batch
    half = (batch + 1) // 2
    half_up = ((half + 127) // 128) * 128
    return min(MAX_TB, half_up)


@jax.jit
def mlp_forward(x, packed_params):
    """x: (B, 9) float32; packed: (w1T (384,9) bf16, b1T (384,1), w2T (3,384) bf16, b2T (3,1))."""
    w1T, b1T, w2T, b2T = packed_params
    B = x.shape[0]
    xT = x.T                              # (9, B): batch on the lane axis
    tb = _pick_tile(B)
    grid = (pl.cdiv(B, tb),)

    oT = pl.pallas_call(
        mlp_kernel,
        out_shape=jax.ShapeDtypeStruct((N_HEADS, B), jnp.float32),
        grid_spec=pltpu.PrefetchScalarGridSpec(
            num_scalar_prefetch=0,
            grid=grid,
            in_specs=[
                # Batch-tiled, lane-dense activations (double-buffered by Pallas).
                pl.BlockSpec((IN_FEATURES, tb), lambda i: (0, i)),
                # Weights/biases: constant index maps -> resident in VMEM.
                pl.BlockSpec((H_ALL, IN_FEATURES), lambda i: (0, 0)),
                pl.BlockSpec((H_ALL, 1), lambda i: (0, 0)),
                pl.BlockSpec((N_HEADS, H_ALL), lambda i: (0, 0)),
                pl.BlockSpec((N_HEADS, 1), lambda i: (0, 0)),
            ],
            out_specs=pl.BlockSpec((N_HEADS, tb), lambda i: (0, i)),
        ),
        compiler_params=pltpu.CompilerParams(
            dimension_semantics=("parallel",),
            vmem_limit_bytes=32 * 1024 * 1024,
        ),
    )(xT, w1T, b1T, w2T, b2T)
    return oT.T                           # (B, 3)


# ---------------------------------------------------------------------------
# Parameter construction (mimics torch.nn.Linear init) and packing.
# ---------------------------------------------------------------------------

def init_linear(key, fan_in, fan_out):
    """torch.nn.Linear-style uniform(+/- 1/sqrt(fan_in)); W stored as (in, out)."""
    kw, kb = jax.random.split(key)
    bound = 1.0 / jnp.sqrt(jnp.float32(fan_in))
    w = jax.random.uniform(kw, (fan_in, fan_out), jnp.float32, -bound, bound)
    b = jax.random.uniform(kb, (1, fan_out), jnp.float32, -bound, bound)
    return w, b


def init_params(key):
    """Per-head params: 3 heads x (w1 (9,128), b1 (1,128), w2 (128,1), b2 (1,1))."""
    params = []
    for head_key in jax.random.split(key, N_HEADS):
        k1, k2 = jax.random.split(head_key)
        w1, b1 = init_linear(k1, IN_FEATURES, HIDDEN)
        w2, b2 = init_linear(k2, HIDDEN, 1)
        params.extend([w1, b1, w2, b2])
    return tuple(params)


def pack_params(params):
    """Pack per-head params into the 4 transposed/fused arrays the kernel consumes."""
    w1s = [params[4 * h + 0] for h in range(N_HEADS)]
    b1s = [params[4 * h + 1] for h in range(N_HEADS)]
    w2s = [params[4 * h + 2] for h in range(N_HEADS)]
    b2s = [params[4 * h + 3] for h in range(N_HEADS)]

    w1T = jnp.concatenate(w1s, axis=1).T.astype(jnp.bfloat16)     # (384, 9) bf16
    b1T = jnp.concatenate(b1s, axis=1).T                          # (384, 1) f32
    # Block-diagonal layer-2 weight, transposed: head h's (128,) vector lives
    # in row h, columns [128h, 128h+128); everything else is exactly zero.
    w2T = jnp.zeros((N_HEADS, H_ALL), jnp.float32)
    for h in range(N_HEADS):
        w2T = w2T.at[h, h * HIDDEN:(h + 1) * HIDDEN].set(w2s[h][:, 0])
    w2T = w2T.astype(jnp.bfloat16)                                # (3, 384) bf16
    b2T = jnp.concatenate(b2s, axis=1).T                          # (3, 1) f32
    return w1T, b1T, w2T, b2T


def mlp_reference(x, params):
    """Pure-JAX f32 reference matching the original per-head PyTorch structure."""
    outs = []
    for h in range(N_HEADS):
        w1, b1, w2, b2 = params[4 * h: 4 * h + 4]
        hdn = jnp.maximum(x @ w1 + b1, 0.0)
        outs.append(hdn @ w2 + b2)
    return jnp.concatenate(outs, axis=1)


# NOTE: `freeze` / `set_grad` only toggle requires_grad for training; they have
# no effect on the forward pass and are intentionally not translated.

if __name__ == "__main__":
    key = jax.random.PRNGKey(0)
    kx, kx2, kp = jax.random.split(key, 3)

    params = init_params(kp)
    packed = pack_params(params)

    # Tolerance is deliberately relaxed vs. the f32 reference: the MXU matmul
    # operands are bf16 (f32 accumulation), giving ~1e-3..1e-2 error.
    ATOL = 5e-2
    RTOL = 5e-2

    # Small-batch check (single grid step, full-dim lane block).
    B = 8
    x = jax.random.normal(kx, (B, IN_FEATURES), jnp.float32)
    out = jax.block_until_ready(mlp_forward(x, packed))
    ref = mlp_reference(x, params)
    assert out.shape == (B, N_HEADS), out.shape
    assert jnp.allclose(out, ref, atol=ATOL, rtol=RTOL), (
        float(jnp.max(jnp.abs(out - ref))))

    # Multi-step grid check with an uneven last lane tile (exercises the
    # tiled/pipelined path and clipping of the partial output block).
    B2 = 2 * MAX_TB + 200
    x2 = jax.random.normal(kx2, (B2, IN_FEATURES), jnp.float32)
    out2 = jax.block_until_ready(mlp_forward(x2, packed))
    ref2 = mlp_reference(x2, params)
    assert out2.shape == (B2, N_HEADS), out2.shape
    assert jnp.allclose(out2, ref2, atol=ATOL, rtol=RTOL), (
        float(jnp.max(jnp.abs(out2 - ref2))))

    print("KERNEL_OK")
</pallas_src>

<mosaic_0001>
module attributes {stable_mosaic.version = 11 : i64} {
  func.func @mlp_kernel(%arg0: i32, %arg1: memref<9x8xf32, #tpu.memory_space<vmem>>, %arg2: memref<384x9xbf16, #tpu.memory_space<vmem>>, %arg3: memref<384x1xf32, #tpu.memory_space<vmem>>, %arg4: memref<3x384xbf16, #tpu.memory_space<vmem>>, %arg5: memref<3x1xf32, #tpu.memory_space<vmem>>, %arg6: memref<3x8xf32, #tpu.memory_space<vmem>>) attributes {dimension_semantics = [#tpu.dimension_semantics<parallel>], iteration_bounds = array<i64: 1>, scalar_prefetch = 0 : i64, scratch_operands = 0 : i64, tpu.core_type = #tpu.core_type<tc>, window_params = [{transform_indices = @transform_0, window_bounds = array<i64: 9, 8>}, {pipeline_mode = #tpu.pipeline_mode<synchronous>, transform_indices = @transform_1, window_bounds = array<i64: 384, 9>}, {pipeline_mode = #tpu.pipeline_mode<synchronous>, transform_indices = @transform_2, window_bounds = array<i64: 384, 1>}, {pipeline_mode = #tpu.pipeline_mode<synchronous>, transform_indices = @transform_3, window_bounds = array<i64: 3, 384>}, {pipeline_mode = #tpu.pipeline_mode<synchronous>, transform_indices = @transform_4, window_bounds = array<i64: 3, 1>}, {transform_indices = @transform_5, window_bounds = array<i64: 3, 8>}]} {
    %c0 = arith.constant 0 : index
    %c0_0 = arith.constant 0 : index
    %0 = vector.load %arg1[%c0, %c0_0] : memref<9x8xf32, #tpu.memory_space<vmem>>, vector<9x8xf32>
    %1 = arith.truncf %0 : vector<9x8xf32> to vector<9x8xbf16>
    %c0_1 = arith.constant 0 : index
    %c0_2 = arith.constant 0 : index
    %2 = vector.load %arg2[%c0_1, %c0_2] : memref<384x9xbf16, #tpu.memory_space<vmem>>, vector<384x9xbf16>
    %cst = arith.constant dense<0.000000e+00> : vector<384x8xf32>
    %3 = tpu.matmul %2, %1, %cst {dimension_numbers = #tpu.dot_dimension_numbers<[1], [0], [0], [1], [0, 0, 1, 1], [], []>} : vector<384x9xbf16>, vector<9x8xbf16>, vector<384x8xf32> -> vector<384x8xf32>
    %c0_3 = arith.constant 0 : index
    %c0_4 = arith.constant 0 : index
    %4 = vector.load %arg3[%c0_3, %c0_4] : memref<384x1xf32, #tpu.memory_space<vmem>>, vector<384x1xf32>
    %5 = vector.broadcast %4 : vector<384x1xf32> to vector<384x8xf32>
    %6 = arith.addf %3, %5 : vector<384x8xf32>
    %cst_5 = arith.constant 0.000000e+00 : f32
    %7 = vector.broadcast %cst_5 : f32 to vector<384x8xf32>
    %8 = arith.maximumf %6, %7 : vector<384x8xf32>
    %c0_6 = arith.constant 0 : index
    %c0_7 = arith.constant 0 : index
    %9 = vector.load %arg4[%c0_6, %c0_7] : memref<3x384xbf16, #tpu.memory_space<vmem>>, vector<3x384xbf16>
    %10 = arith.truncf %8 : vector<384x8xf32> to vector<384x8xbf16>
    %cst_8 = arith.constant dense<0.000000e+00> : vector<3x8xf32>
    %11 = tpu.matmul %9, %10, %cst_8 {dimension_numbers = #tpu.dot_dimension_numbers<[1], [0], [0], [1], [0, 0, 1, 1], [], []>} : vector<3x384xbf16>, vector<384x8xbf16>, vector<3x8xf32> -> vector<3x8xf32>
    %c0_9 = arith.constant 0 : index
    %c0_10 = arith.constant 0 : index
    %12 = vector.load %arg5[%c0_9, %c0_10] : memref<3x1xf32, #tpu.memory_space<vmem>>, vector<3x1xf32>
    %13 = vector.broadcast %12 : vector<3x1xf32> to vector<3x8xf32>
    %14 = arith.addf %11, %13 : vector<3x8xf32>
    %c0_11 = arith.constant 0 : index
    %c0_12 = arith.constant 0 : index
    %15 = vector.load %arg6[%c0_11, %c0_12] : memref<3x8xf32, #tpu.memory_space<vmem>>, vector<3x8xf32>
    tpu.vector_store %arg6[%c0_11, %c0_12], %14 {strides = array<i32>} : memref<3x8xf32, #tpu.memory_space<vmem>>, vector<3x8xf32>,
    return
  }
  func.func @transform_0(%arg0: i32) -> (i32, i32) {
    %c0_i32 = arith.constant 0 : i32
    %c0_i32_0 = arith.constant 0 : i32
    return %c0_i32, %arg0 : i32, i32
  }
  func.func @transform_1(%arg0: i32) -> (i32, i32) {
    %c0_i32 = arith.constant 0 : i32
    %c0_i32_0 = arith.constant 0 : i32
    %c0_i32_1 = arith.constant 0 : i32
    return %c0_i32, %c0_i32_0 : i32, i32
  }
  func.func @transform_2(%arg0: i32) -> (i32, i32) {
    %c0_i32 = arith.constant 0 : i32
    %c0_i32_0 = arith.constant 0 : i32
    %c0_i32_1 = arith.constant 0 : i32
    return %c0_i32, %c0_i32_0 : i32, i32
  }
  func.func @transform_3(%arg0: i32) -> (i32, i32) {
    %c0_i32 = arith.constant 0 : i32
    %c0_i32_0 = arith.constant 0 : i32
    %c0_i32_1 = arith.constant 0 : i32
    return %c0_i32, %c0_i32_0 : i32, i32
  }
  func.func @transform_4(%arg0: i32) -> (i32, i32) {
    %c0_i32 = arith.constant 0 : i32
    %c0_i32_0 = arith.constant 0 : i32
    %c0_i32_1 = arith.constant 0 : i32
    return %c0_i32, %c0_i32_0 : i32, i32
  }
  func.func @transform_5(%arg0: i32) -> (i32, i32) {
    %c0_i32 = arith.constant 0 : i32
    %c0_i32_0 = arith.constant 0 : i32
    return %c0_i32, %arg0 : i32, i32
  }
}

</mosaic_0001>

<llo_original>
// kernel: mlp_forward.1
$region0: #{mlp_forward.1}
  #allocation0 [shape = 'u32[]', space=smem, size = 0x4, offset = 0x4, fixed_abs, tag = 'smem constant byte address 0x4 - core index']
  #allocation1 [shape = 'u32[144,128]{1,0:T(1,128)}', space=vmem, size = 0x12000, scoped, tag = 'internal scratch']
  %s0 = inlined_call_operand.vmem [shape: f32[9,8], index: 0, kind: input, shape index: {}]
  %s1 = inlined_call_operand.vmem [shape: bf16[384,9], index: 1, kind: input, shape index: {}]
  %s2 = inlined_call_operand.vmem [shape: f32[384,1], index: 2, kind: input, shape index: {}]
  %s3 = inlined_call_operand.vmem [shape: bf16[3,384], index: 3, kind: input, shape index: {}]
  %s4 = inlined_call_operand.vmem [shape: f32[3,1], index: 4, kind: input, shape index: {}]
  %s5 = inlined_call_operand.hbm [shape: f32[3,8], index: 5, kind: output, shape index: {}]
  %s6 = sld [smem:[#allocation0]]
  $region30: #{mlp_forward.1} parent=0
    _
  %s8 = ssub.s32 1, %s6
  %s9 = scalar_select 0, %s8, %s6
  $region1: #{mlp_forward.1} parent=0
    #allocation2 [shape = 'u8[2048]{0}', space=vmem, size = 0x800, scoped, tag = 'output window, operand 0, single buffered']
    #allocation3 [shape = 's32[1]{0}', space=sflag, size = 0x4, scoped, tag = 'scoped memory for mlp_forward.1']
    %10 = vsyncpa [#allocation3], 0
    // Predicated region
    $region2: #{mlp_forward.1} parent=1 // pred_check
      _
    $region3: #{mlp_forward.1} parent=1 // pred_check_branch
      %12 = sbr.rel (0) target = $region5
    $region4: #{mlp_forward.1} parent=1 // pred_region
      _
    $region5: #{mlp_forward.1} parent=1 // pred_fallthru
      _
    // Predicated region
    $region6: #{mlp_forward.1} parent=1 // pred_check
      _
    $region7: #{mlp_forward.1} parent=1 // pred_check_branch
      %14 = sbr.rel (0) target = $region9
    $region8: #{mlp_forward.1} parent=1 // pred_region
      _
    $region9: #{mlp_forward.1} parent=1 // pred_fallthru
      _
    // Predicated region
    $region10: #{mlp_forward.1} parent=1 // pred_check
      _
    $region11: #{mlp_forward.1} parent=1 // pred_check_branch
      %16 = sbr.rel (0) target = $region13
    $region12: #{mlp_forward.1} parent=1 // pred_region
      _
    $region13: #{mlp_forward.1} parent=1 // pred_fallthru
      _
    // Predicated region
    $region14: #{mlp_forward.1} parent=1 // pred_check
      _
    $region15: #{mlp_forward.1} parent=1 // pred_check_branch
      %18 = sbr.rel (0) target = $region17
    $region16: #{mlp_forward.1} parent=1 // pred_region
      _
    $region17: #{mlp_forward.1} parent=1 // pred_fallthru
      _
    // Predicated region
    $region18: #{mlp_forward.1} parent=1 // pred_check
      _
    $region19: #{mlp_forward.1} parent=1 // pred_check_branch
      %20 = sbr.rel (0) target = $region21
    $region20: #{mlp_forward.1} parent=1 // pred_region
      _
    $region21: #{mlp_forward.1} parent=1 // pred_fallthru
      _
    %v22 = vld [vmem:[%s0] sm:$0xff]
    %v23 = vld [vmem:[%s0 + $0x8] sm:$0x1]
    %v24 = vpack.c.bf16 %v23, %v22
    %v25 = vld [vmem:[%s1] sm:$0xf]
    %v26 = vld [vmem:[%s1 + $0x4] sm:$0xf]
    %v27 = vld [vmem:[%s1 + $0x8] sm:$0xf]
    %v28 = vld [vmem:[%s1 + $0xc] sm:$0xf]
    %v29 = vld [vmem:[%s1 + $0x10] sm:$0xf]
    %v30 = vld [vmem:[%s1 + $0x14] sm:$0xf]
    %v31 = vld [vmem:[%s1 + $0x18] sm:$0xf]
    %v32 = vld [vmem:[%s1 + $0x1c] sm:$0xf]
    %v33 = vld [vmem:[%s1 + $0x20] sm:$0xf]
    %v34 = vld [vmem:[%s1 + $0x24] sm:$0xf]
    %v35 = vld [vmem:[%s1 + $0x28] sm:$0xf]
    %v36 = vld [vmem:[%s1 + $0x2c] sm:$0xf]
    %v37 = vld [vmem:[%s1 + $0x30] sm:$0xf]
    %v38 = vld [vmem:[%s1 + $0x34] sm:$0xf]
    %v39 = vld [vmem:[%s1 + $0x38] sm:$0xf]
    %v40 = vld [vmem:[%s1 + $0x3c] sm:$0xf]
    %v41 = vld [vmem:[%s1 + $0x40] sm:$0xf]
    %v42 = vld [vmem:[%s1 + $0x44] sm:$0xf]
    %v43 = vld [vmem:[%s1 + $0x48] sm:$0xf]
    %v44 = vld [vmem:[%s1 + $0x4c] sm:$0xf]
    %v45 = vld [vmem:[%s1 + $0x50] sm:$0xf]
    %v46 = vld [vmem:[%s1 + $0x54] sm:$0xf]
    %v47 = vld [vmem:[%s1 + $0x58] sm:$0xf]
    %v48 = vld [vmem:[%s1 + $0x5c] sm:$0xf]
    %v49 = vld [vmem:[%s1 + $0x60] sm:$0xf]
    %v50 = vld [vmem:[%s1 + $0x64] sm:$0xf]
    %v51 = vld [vmem:[%s1 + $0x68] sm:$0xf]
    %v52 = vld [vmem:[%s1 + $0x6c] sm:$0xf]
    %v53 = vld [vmem:[%s1 + $0x70] sm:$0xf]
    %v54 = vld [vmem:[%s1 + $0x74] sm:$0xf]
    %v55 = vld [vmem:[%s1 + $0x78] sm:$0xf]
    %v56 = vld [vmem:[%s1 + $0x7c] sm:$0xf]
    %v57 = vld [vmem:[%s1 + $0x80] sm:$0xf]
    %v58 = vld [vmem:[%s1 + $0x84] sm:$0xf]
    %v59 = vld [vmem:[%s1 + $0x88] sm:$0xf]
    %v60 = vld [vmem:[%s1 + $0x8c] sm:$0xf]
    %v61 = vld [vmem:[%s1 + $0x90] sm:$0xf]
    %v62 = vld [vmem:[%s1 + $0x94] sm:$0xf]
    %v63 = vld [vmem:[%s1 + $0x98] sm:$0xf]
    %v64 = vld [vmem:[%s1 + $0x9c] sm:$0xf]
    %v65 = vld [vmem:[%s1 + $0xa0] sm:$0xf]
    %v66 = vld [vmem:[%s1 + $0xa4] sm:$0xf]
    %v67 = vld [vmem:[%s1 + $0xa8] sm:$0xf]
    %v68 = vld [vmem:[%s1 + $0xac] sm:$0xf]
    %v69 = vld [vmem:[%s1 + $0xb0] sm:$0xf]
    %v70 = vld [vmem:[%s1 + $0xb4] sm:$0xf]
    %v71 = vld [vmem:[%s1 + $0xb8] sm:$0xf]
    %v72 = vld [vmem:[%s1 + $0xbc] sm:$0xf]
    %v73 = vld [vmem:[%s2] sm:$0xff]
    %v74 = vld [vmem:[%s2 + $0x8] sm:$0xff]
    %v75 = vld [vmem:[%s2 + $0x10] sm:$0xff]
    %v76 = vld [vmem:[%s2 + $0x18] sm:$0xff]
    %v77 = vld [vmem:[%s2 + $0x20] sm:$0xff]
    %v78 = vld [vmem:[%s2 + $0x28] sm:$0xff]
    %v79 = vld [vmem:[%s2 + $0x30] sm:$0xff]
    %v80 = vld [vmem:[%s2 + $0x38] sm:$0xff]
    %v81 = vld [vmem:[%s2 + $0x40] sm:$0xff]
    %v82 = vld [vmem:[%s2 + $0x48] sm:$0xff]
    %v83 = vld [vmem:[%s2 + $0x50] sm:$0xff]
    %v84 = vld [vmem:[%s2 + $0x58] sm:$0xff]
    %v85 = vld [vmem:[%s2 + $0x60] sm:$0xff]
    %v86 = vld [vmem:[%s2 + $0x68] sm:$0xff]
    %v87 = vld [vmem:[%s2 + $0x70] sm:$0xff]
    %v88 = vld [vmem:[%s2 + $0x78] sm:$0xff]
    %v89 = vld [vmem:[%s2 + $0x80] sm:$0xff]
    %v90 = vld [vmem:[%s2 + $0x88] sm:$0xff]
    %v91 = vld [vmem:[%s2 + $0x90] sm:$0xff]
    %v92 = vld [vmem:[%s2 + $0x98] sm:$0xff]
    %v93 = vld [vmem:[%s2 + $0xa0] sm:$0xff]
    %v94 = vld [vmem:[%s2 + $0xa8] sm:$0xff]
    %v95 = vld [vmem:[%s2 + $0xb0] sm:$0xff]
    %v96 = vld [vmem:[%s2 + $0xb8] sm:$0xff]
    %v97 = vld [vmem:[%s2 + $0xc0] sm:$0xff]
    %v98 = vld [vmem:[%s2 + $0xc8] sm:$0xff]
    %v99 = vld [vmem:[%s2 + $0xd0] sm:$0xff]
    %v100 = vld [vmem:[%s2 + $0xd8] sm:$0xff]
    %v101 = vld [vmem:[%s2 + $0xe0] sm:$0xff]
    %v102 = vld [vmem:[%s2 + $0xe8] sm:$0xff]
    %v103 = vld [vmem:[%s2 + $0xf0] sm:$0xff]
    %v104 = vld [vmem:[%s2 + $0xf8] sm:$0xff]
    %v105 = vld [vmem:[%s2 + $0x100] sm:$0xff]
    %v106 = vld [vmem:[%s2 + $0x108] sm:$0xff]
    %v107 = vld [vmem:[%s2 + $0x110] sm:$0xff]
    %v108 = vld [vmem:[%s2 + $0x118] sm:$0xff]
    %v109 = vld [vmem:[%s2 + $0x120] sm:$0xff]
    %v110 = vld [vmem:[%s2 + $0x128] sm:$0xff]
    %v111 = vld [vmem:[%s2 + $0x130] sm:$0xff]
    %v112 = vld [vmem:[%s2 + $0x138] sm:$0xff]
    %v113 = vld [vmem:[%s2 + $0x140] sm:$0xff]
    %v114 = vld [vmem:[%s2 + $0x148] sm:$0xff]
    %v115 = vld [vmem:[%s2 + $0x150] sm:$0xff]
    %v116 = vld [vmem:[%s2 + $0x158] sm:$0xff]
    %v117 = vld [vmem:[%s2 + $0x160] sm:$0xff]
    %v118 = vld [vmem:[%s2 + $0x168] sm:$0xff]
    %v119 = vld [vmem:[%s2 + $0x170] sm:$0xff]
    %v120 = vld [vmem:[%s2 + $0x178] sm:$0xff]
    %122 = vset.pattern.permute.xlu0 0
    %123 = vperm.xlu0 %122, %v73
    %v124 = vpop.permute.xlu0 %123
    %127 = vset.pattern.permute.xlu0 0
    %128 = vperm.xlu0 %127, %v74
    %v129 = vpop.permute.xlu0 %128
    %132 = vset.pattern.permute.xlu0 0
    %133 = vperm.xlu0 %132, %v75
    %v134 = vpop.permute.xlu0 %133
    %137 = vset.pattern.permute.xlu0 0
    %138 = vperm.xlu0 %137, %v76
    %v139 = vpop.permute.xlu0 %138
    %142 = vset.pattern.permute.xlu0 0
    %143 = vperm.xlu0 %142, %v77
    %v144 = vpop.permute.xlu0 %143
    %147 = vset.pattern.permute.xlu0 0
    %148 = vperm.xlu0 %147, %v78
    %v149 = vpop.permute.xlu0 %148
    %152 = vset.pattern.permute.xlu0 0
    %153 = vperm.xlu0 %152, %v79
    %v154 = vpop.permute.xlu0 %153
    %157 = vset.pattern.permute.xlu0 0
    %158 = vperm.xlu0 %157, %v80
    %v159 = vpop.permute.xlu0 %158
    %162 = vset.pattern.permute.xlu0 0
    %163 = vperm.xlu0 %162, %v81
    %v164 = vpop.permute.xlu0 %163
    %167 = vset.pattern.permute.xlu0 0
    %168 = vperm.xlu0 %167, %v82
    %v169 = vpop.permute.xlu0 %168
    %172 = vset.pattern.permute.xlu0 0
    %173 = vperm.xlu0 %172, %v83
    %v174 = vpop.permute.xlu0 %173
    %177 = vset.pattern.permute.xlu0 0
    %178 = vperm.xlu0 %177, %v84
    %v179 = vpop.permute.xlu0 %178
    %182 = vset.pattern.permute.xlu0 0
    %183 = vperm.xlu0 %182, %v85
    %v184 = vpop.permute.xlu0 %183
    %187 = vset.pattern.permute.xlu0 0
    %188 = vperm.xlu0 %187, %v86
    %v189 = vpop.permute.xlu0 %188
    %192 = vset.pattern.permute.xlu0 0
    %193 = vperm.xlu0 %192, %v87
    %v194 = vpop.permute.xlu0 %193
    %197 = vset.pattern.permute.xlu0 0
    %198 = vperm.xlu0 %197, %v88
    %v199 = vpop.permute.xlu0 %198
    %202 = vset.pattern.permute.xlu0 0
    %203 = vperm.xlu0 %202, %v89
    %v204 = vpop.permute.xlu0 %203
    %207 = vset.pattern.permute.xlu0 0
    %208 = vperm.xlu0 %207, %v90
    %v209 = vpop.permute.xlu0 %208
    %212 = vset.pattern.permute.xlu0 0
    %213 = vperm.xlu0 %212, %v91
    %v214 = vpop.permute.xlu0 %213
    %217 = vset.pattern.permute.xlu0 0
    %218 = vperm.xlu0 %217, %v92
    %v219 = vpop.permute.xlu0 %218
    %222 = vset.pattern.permute.xlu0 0
    %223 = vperm.xlu0 %222, %v93
    %v224 = vpop.permute.xlu0 %223
    %227 = vset.pattern.permute.xlu0 0
    %228 = vperm.xlu0 %227, %v94
    %v229 = vpop.permute.xlu0 %228
    %232 = vset.pattern.permute.xlu0 0
    %233 = vperm.xlu0 %232, %v95
    %v234 = vpop.permute.xlu0 %233
    %237 = vset.pattern.permute.xlu0 0
    %238 = vperm.xlu0 %237, %v96
    %v239 = vpop.permute.xlu0 %238
    %242 = vset.pattern.permute.xlu0 0
    %243 = vperm.xlu0 %242, %v97
    %v244 = vpop.permute.xlu0 %243
    %247 = vset.pattern.permute.xlu0 0
    %248 = vperm.xlu0 %247, %v98
    %v249 = vpop.permute.xlu0 %248
    %252 = vset.pattern.permute.xlu0 0
    %253 = vperm.xlu0 %252, %v99
    %v254 = vpop.permute.xlu0 %253
    %257 = vset.pattern.permute.xlu0 0
    %258 = vperm.xlu0 %257, %v100
    %v259 = vpop.permute.xlu0 %258
    %262 = vset.pattern.permute.xlu0 0
    %263 = vperm.xlu0 %262, %v101
    %v264 = vpop.permute.xlu0 %263
    %267 = vset.pattern.permute.xlu0 0
    %268 = vperm.xlu0 %267, %v102
    %v269 = vpop.permute.xlu0 %268
    %272 = vset.pattern.permute.xlu0 0
    %273 = vperm.xlu0 %272, %v103
    %v274 = vpop.permute.xlu0 %273
    %277 = vset.pattern.permute.xlu0 0
    %278 = vperm.xlu0 %277, %v104
    %v279 = vpop.permute.xlu0 %278
    %282 = vset.pattern.permute.xlu0 0
    %283 = vperm.xlu0 %282, %v105
    %v284 = vpop.permute.xlu0 %283
    %287 = vset.pattern.permute.xlu0 0
    %288 = vperm.xlu0 %287, %v106
    %v289 = vpop.permute.xlu0 %288
    %292 = vset.pattern.permute.xlu0 0
    %293 = vperm.xlu0 %292, %v107
    %v294 = vpop.permute.xlu0 %293
    %297 = vset.pattern.permute.xlu0 0
    %298 = vperm.xlu0 %297, %v108
    %v299 = vpop.permute.xlu0 %298
    %302 = vset.pattern.permute.xlu0 0
    %303 = vperm.xlu0 %302, %v109
    %v304 = vpop.permute.xlu0 %303
    %307 = vset.pattern.permute.xlu0 0
    %308 = vperm.xlu0 %307, %v110
    %v309 = vpop.permute.xlu0 %308
    %312 = vset.pattern.permute.xlu0 0
    %313 = vperm.xlu0 %312, %v111
    %v314 = vpop.permute.xlu0 %313
    %317 = vset.pattern.permute.xlu0 0
    %318 = vperm.xlu0 %317, %v112
    %v319 = vpop.permute.xlu0 %318
    %322 = vset.pattern.permute.xlu0 0
    %323 = vperm.xlu0 %322, %v113
    %v324 = vpop.permute.xlu0 %323
    %327 = vset.pattern.permute.xlu0 0
    %328 = vperm.xlu0 %327, %v114
    %v329 = vpop.permute.xlu0 %328
    %332 = vset.pattern.permute.xlu0 0
    %333 = vperm.xlu0 %332, %v115
    %v334 = vpop.permute.xlu0 %333
    %337 = vset.pattern.permute.xlu0 0
    %338 = vperm.xlu0 %337, %v116
    %v339 = vpop.permute.xlu0 %338
    %342 = vset.pattern.permute.xlu0 0
    %343 = vperm.xlu0 %342, %v117
    %v344 = vpop.permute.xlu0 %343
    %347 = vset.pattern.permute.xlu0 0
    %348 = vperm.xlu0 %347, %v118
    %v349 = vpop.permute.xlu0 %348
    %352 = vset.pattern.permute.xlu0 0
    %353 = vperm.xlu0 %352, %v119
    %v354 = vpop.permute.xlu0 %353
    %357 = vset.pattern.permute.xlu0 0
    %358 = vperm.xlu0 %357, %v120
    %v359 = vpop.permute.xlu0 %358
    %v409 = vunpack.c.l.b16 %v25
    %v410 = vunpack.c.l.b16 %v26
    %v411 = vunpack.c.l.b16 %v27
    %v412 = vunpack.c.l.b16 %v28
    %v413 = vunpack.c.l.b16 %v29
    %v414 = vunpack.c.l.b16 %v30
    %v415 = vunpack.c.l.b16 %v31
    %v416 = vunpack.c.l.b16 %v32
    %v417 = vunpack.c.l.b16 %v33
    %v418 = vunpack.c.l.b16 %v34
    %v419 = vunpack.c.l.b16 %v35
    %v420 = vunpack.c.l.b16 %v36
    %v421 = vunpack.c.l.b16 %v37
    %v422 = vunpack.c.l.b16 %v38
    %v423 = vunpack.c.l.b16 %v39
    %v424 = vunpack.c.l.b16 %v40
    %v425 = vunpack.c.l.b16 %v41
    %v426 = vunpack.c.l.b16 %v42
    %v427 = vunpack.c.l.b16 %v43
    %v428 = vunpack.c.l.b16 %v44
    %v429 = vunpack.c.l.b16 %v45
    %v430 = vunpack.c.l.b16 %v46
    %v431 = vunpack.c.l.b16 %v47
    %v432 = vunpack.c.l.b16 %v48
    %v433 = vunpack.c.l.b16 %v49
    %v434 = vunpack.c.l.b16 %v50
    %v435 = vunpack.c.l.b16 %v51
    %v436 = vunpack.c.l.b16 %v52
    %v437 = vunpack.c.l.b16 %v53
    %v438 = vunpack.c.l.b16 %v54
    %v439 = vunpack.c.l.b16 %v55
    %v440 = vunpack.c.l.b16 %v56
    %v441 = vunpack.c.l.b16 %v57
    %v442 = vunpack.c.l.b16 %v58
    %v443 = vunpack.c.l.b16 %v59
    %v444 = vunpack.c.l.b16 %v60
    %v445 = vunpack.c.l.b16 %v61
    %v446 = vunpack.c.l.b16 %v62
    %v447 = vunpack.c.l.b16 %v63
    %v448 = vunpack.c.l.b16 %v64
    %v449 = vunpack.c.l.b16 %v65
    %v450 = vunpack.c.l.b16 %v66
    %v451 = vunpack.c.l.b16 %v67
    %v452 = vunpack.c.l.b16 %v68
    %v453 = vunpack.c.l.b16 %v69
    %v454 = vunpack.c.l.b16 %v70
    %v455 = vunpack.c.l.b16 %v71
    %v456 = vunpack.c.l.b16 %v72
    %v457 = vpack.c.b16 %v410, %v409
    %v458 = vpack.c.b16 %v412, %v411
    %v459 = vpack.c.b16 %v414, %v413
    %v460 = vpack.c.b16 %v416, %v415
    %v461 = vpack.c.b16 %v418, %v417
    %v462 = vpack.c.b16 %v420, %v419
    %v463 = vpack.c.b16 %v422, %v421
    %v464 = vpack.c.b16 %v424, %v423
    %v465 = vpack.c.b16 %v426, %v425
    %v466 = vpack.c.b16 %v428, %v427
    %v467 = vpack.c.b16 %v430, %v429
    %v468 = vpack.c.b16 %v432, %v431
    %v469 = vpack.c.b16 %v434, %v433
    %v470 = vpack.c.b16 %v436, %v435
    %v471 = vpack.c.b16 %v438, %v437
    %v472 = vpack.c.b16 %v440, %v439
    %v473 = vpack.c.b16 %v442, %v441
    %v474 = vpack.c.b16 %v444, %v443
    %v475 = vpack.c.b16 %v446, %v445
    %v476 = vpack.c.b16 %v448, %v447
    %v477 = vpack.c.b16 %v450, %v449
    %v478 = vpack.c.b16 %v452, %v451
    %v479 = vpack.c.b16 %v454, %v453
    %v480 = vpack.c.b16 %v456, %v455
    %vm481 = vcmask 72704
    %v483 = vsel %vm481, %v457, 0
    %v486 = vsel %vm481, %v458, 0
    %v489 = vsel %vm481, %v459, 0
    %v492 = vsel %vm481, %v460, 0
    %v495 = vsel %vm481, %v461, 0
    %v498 = vsel %vm481, %v462, 0
    %v501 = vsel %vm481, %v463, 0
    %v504 = vsel %vm481, %v464, 0
    %v507 = vsel %vm481, %v465, 0
    %v510 = vsel %vm481, %v466, 0
    %v513 = vsel %vm481, %v467, 0
    %v516 = vsel %vm481, %v468, 0
    %v519 = vsel %vm481, %v469, 0
    %v522 = vsel %vm481, %v470, 0
    %v525 = vsel %vm481, %v471, 0
    %v528 = vsel %vm481, %v472, 0
    %v531 = vsel %vm481, %v473, 0
    %v534 = vsel %vm481, %v474, 0
    %v537 = vsel %vm481, %v475, 0
    %v540 = vsel %vm481, %v476, 0
    %v543 = vsel %vm481, %v477, 0
    %v546 = vsel %vm481, %v478, 0
    %v549 = vsel %vm481, %v479, 0
    %v552 = vsel %vm481, %v480, 0
    %vm554 = vcmask 1043456
    %vm555 = vcmask 1044480
    %v556 = vsel %vm554, 4294967295, 65535
    %v557 = vsel %vm555, %v556, 0
    %v559 = vand.u32 %v24, %v557
    %561 = vmatprep.subr.bf16.mxu0 0
    %562 = vmatpush1.bf16.msra.mxu0 0
    %563 = vmatprep.subr.bf16.mxu0 0
    %564 = vmatpush1.bf16.msra.mxu0 0
    %565 = vmatprep.subr.bf16.mxu0 0
    %566 = vmatpush1.bf16.msra.mxu0 0
    %567 = vmatprep.subr.bf16.mxu0 0
    %568 = vmatpush1.bf16.msra.mxu0 0
    %569 = vmatprep.subr.bf16.mxu0 0
    %570 = vmatpush1.bf16.msra.mxu0 0
    %571 = vmatprep.subr.bf16.mxu0 0
    %572 = vmatpush1.bf16.msra.mxu0 0
    %573 = vmatprep.subr.bf16.mxu0 0
    %574 = vmatpush1.bf16.msra.mxu0 0
    %575 = vmatprep.subr.bf16.mxu0 0
    %576 = vmatpush1.bf16.msra.mxu0 %v559
    %577 = vmatprep.subr.bf16.mxu0 0
    %578 = vmatpush2.bf16.msra.mxu0 0
    %579 = vmatprep.subr.bf16.mxu0 0
    %580 = vmatpush2.bf16.msra.mxu0 0
    %581 = vmatprep.subr.bf16.mxu0 0
    %582 = vmatpush2.bf16.msra.mxu0 0
    %583 = vmatprep.subr.bf16.mxu0 0
    %584 = vmatpush2.bf16.msra.mxu0 0
    %585 = vmatprep.subr.bf16.mxu0 0
    %586 = vmatpush2.bf16.msra.mxu0 0
    %587 = vmatprep.subr.bf16.mxu0 0
    %588 = vmatpush2.bf16.msra.mxu0 0
    %589 = vmatprep.subr.bf16.mxu0 0
    %590 = vmatpush2.bf16.msra.mxu0 0
    %591 = vmatprep.subr.bf16.mxu0 0
    %592 = vmatpush2.bf16.msra.mxu0 0
    %593 = vmatprep.mubr.bf16.mxu0 0
    %594 = vmatmul.mubr.bf16.gmra.mxu0 %v483
    %v595 = vpop.f32.mrf.mxu0
    %v596 = vadd.f32 %v124, %v595
    %v597 = vpop.f32.mrf.mxu0
    %v598 = vpop.f32.mrf.mxu0
    %v599 = vadd.f32 %v129, %v598
    %v600 = vpop.f32.mrf.mxu0
    %601 = vmatprep.mubr.bf16.mxu0 0
    %602 = vmatmul.mubr.bf16.gmra.mxu0 %v486
    %v603 = vpop.f32.mrf.mxu0
    %v604 = vadd.f32 %v134, %v603
    %v605 = vpop.f32.mrf.mxu0
    %v606 = vpop.f32.mrf.mxu0
    %v607 = vadd.f32 %v139, %v606
    %v608 = vpop.f32.mrf.mxu0
    %609 = vmatprep.mubr.bf16.mxu0 0
    %610 = vmatmul.mubr.bf16.gmra.mxu0 %v489
    %v611 = vpop.f32.mrf.mxu0
    %v612 = vadd.f32 %v144, %v611
    %v613 = vpop.f32.mrf.mxu0
    %v614 = vpop.f32.mrf.mxu0
    %v615 = vadd.f32 %v149, %v614
    %v616 = vpop.f32.mrf.mxu0
    %617 = vmatprep.mubr.bf16.mxu0 0
    %618 = vmatmul.mubr.bf16.gmra.mxu0 %v492
    %v619 = vpop.f32.mrf.mxu0
    %v620 = vadd.f32 %v154, %v619
    %v621 = vpop.f32.mrf.mxu0
    %v622 = vpop.f32.mrf.mxu0
    %v623 = vadd.f32 %v159, %v622
    %v624 = vpop.f32.mrf.mxu0
    %625 = vmatprep.mubr.bf16.mxu0 0
    %626 = vmatmul.mubr.bf16.gmra.mxu0 %v495
    %v627 = vpop.f32.mrf.mxu0
    %v628 = vadd.f32 %v164, %v627
    %v629 = vpop.f32.mrf.mxu0
    %v630 = vpop.f32.mrf.mxu0
    %v631 = vadd.f32 %v169, %v630
    %v632 = vpop.f32.mrf.mxu0
    %633 = vmatprep.mubr.bf16.mxu0 0
    %634 = vmatmul.mubr.bf16.gmra.mxu0 %v498
    %v635 = vpop.f32.mrf.mxu0
    %v636 = vadd.f32 %v174, %v635
    %v637 = vpop.f32.mrf.mxu0
    %v638 = vpop.f32.mrf.mxu0
    %v639 = vadd.f32 %v179, %v638
    %v640 = vpop.f32.mrf.mxu0
    %641 = vmatprep.mubr.bf16.mxu0 0
    %642 = vmatmul.mubr.bf16.gmra.mxu0 %v501
    %v643 = vpop.f32.mrf.mxu0
    %v644 = vadd.f32 %v184, %v643
    %v645 = vpop.f32.mrf.mxu0
    %v646 = vpop.f32.mrf.mxu0
    %v647 = vadd.f32 %v189, %v646
    %v648 = vpop.f32.mrf.mxu0
    %649 = vmatprep.mubr.bf16.mxu0 0
    %650 = vmatmul.mubr.bf16.gmra.mxu0 %v504
    %v651 = vpop.f32.mrf.mxu0
    %v652 = vadd.f32 %v194, %v651
    %v653 = vpop.f32.mrf.mxu0
    %v654 = vpop.f32.mrf.mxu0
    %v655 = vadd.f32 %v199, %v654
    %v656 = vpop.f32.mrf.mxu0
    %657 = vmatprep.mubr.bf16.mxu0 0
    %658 = vmatmul.mubr.bf16.gmra.mxu0 %v507
    %v659 = vpop.f32.mrf.mxu0
    %v660 = vadd.f32 %v204, %v659
    %v661 = vpop.f32.mrf.mxu0
    %v662 = vpop.f32.mrf.mxu0
    %v663 = vadd.f32 %v209, %v662
    %v664 = vpop.f32.mrf.mxu0
    %665 = vmatprep.mubr.bf16.mxu0 0
    %666 = vmatmul.mubr.bf16.gmra.mxu0 %v510
    %v667 = vpop.f32.mrf.mxu0
    %v668 = vadd.f32 %v214, %v667
    %v669 = vpop.f32.mrf.mxu0
    %v670 = vpop.f32.mrf.mxu0
    %v671 = vadd.f32 %v219, %v670
    %v672 = vpop.f32.mrf.mxu0
    %673 = vmatprep.mubr.bf16.mxu0 0
    %674 = vmatmul.mubr.bf16.gmra.mxu0 %v513
    %v675 = vpop.f32.mrf.mxu0
    %v676 = vadd.f32 %v224, %v675
    %v677 = vpop.f32.mrf.mxu0
    %v678 = vpop.f32.mrf.mxu0
    %v679 = vadd.f32 %v229, %v678
    %v680 = vpop.f32.mrf.mxu0
    %681 = vmatprep.mubr.bf16.mxu0 0
    %682 = vmatmul.mubr.bf16.gmra.mxu0 %v516
    %v683 = vpop.f32.mrf.mxu0
    %v684 = vadd.f32 %v234, %v683
    %v685 = vpop.f32.mrf.mxu0
    %v686 = vpop.f32.mrf.mxu0
    %v687 = vadd.f32 %v239, %v686
    %v688 = vpop.f32.mrf.mxu0
    %689 = vmatprep.mubr.bf16.mxu0 0
    %690 = vmatmul.mubr.bf16.gmra.mxu0 %v519
    %v691 = vpop.f32.mrf.mxu0
    %v692 = vadd.f32 %v244, %v691
    %v693 = vpop.f32.mrf.mxu0
    %v694 = vpop.f32.mrf.mxu0
    %v695 = vadd.f32 %v249, %v694
    %v696 = vpop.f32.mrf.mxu0
    %697 = vmatprep.mubr.bf16.mxu0 0
    %698 = vmatmul.mubr.bf16.gmra.mxu0 %v522
    %v699 = vpop.f32.mrf.mxu0
    %v700 = vadd.f32 %v254, %v699
    %v701 = vpop.f32.mrf.mxu0
    %v702 = vpop.f32.mrf.mxu0
    %v703 = vadd.f32 %v259, %v702
    %v704 = vpop.f32.mrf.mxu0
    %705 = vmatprep.mubr.bf16.mxu0 0
    %706 = vmatmul.mubr.bf16.gmra.mxu0 %v525
    %v707 = vpop.f32.mrf.mxu0
    %v708 = vadd.f32 %v264, %v707
    %v709 = vpop.f32.mrf.mxu0
    %v710 = vpop.f32.mrf.mxu0
    %v711 = vadd.f32 %v269, %v710
    %v712 = vpop.f32.mrf.mxu0
    %713 = vmatprep.mubr.bf16.mxu0 0
    %714 = vmatmul.mubr.bf16.gmra.mxu0 %v528
    %v715 = vpop.f32.mrf.mxu0
    %v716 = vadd.f32 %v274, %v715
    %v717 = vpop.f32.mrf.mxu0
    %v718 = vpop.f32.mrf.mxu0
    %v719 = vadd.f32 %v279, %v718
    %v720 = vpop.f32.mrf.mxu0
    %721 = vmatprep.mubr.bf16.mxu0 0
    %722 = vmatmul.mubr.bf16.gmra.mxu0 %v531
    %v723 = vpop.f32.mrf.mxu0
    %v724 = vadd.f32 %v284, %v723
    %v725 = vpop.f32.mrf.mxu0
    %v726 = vpop.f32.mrf.mxu0
    %v727 = vadd.f32 %v289, %v726
    %v728 = vpop.f32.mrf.mxu0
    %729 = vmatprep.mubr.bf16.mxu0 0
    %730 = vmatmul.mubr.bf16.gmra.mxu0 %v534
    %v731 = vpop.f32.mrf.mxu0
    %v732 = vadd.f32 %v294, %v731
    %v733 = vpop.f32.mrf.mxu0
    %v734 = vpop.f32.mrf.mxu0
    %v735 = vadd.f32 %v299, %v734
    %v736 = vpop.f32.mrf.mxu0
    %737 = vmatprep.mubr.bf16.mxu0 0
    %738 = vmatmul.mubr.bf16.gmra.mxu0 %v537
    %v739 = vpop.f32.mrf.mxu0
    %v740 = vadd.f32 %v304, %v739
    %v741 = vpop.f32.mrf.mxu0
    %v742 = vpop.f32.mrf.mxu0
    %v743 = vadd.f32 %v309, %v742
    %v744 = vpop.f32.mrf.mxu0
    %745 = vmatprep.mubr.bf16.mxu0 0
    %746 = vmatmul.mubr.bf16.gmra.mxu0 %v540
    %v747 = vpop.f32.mrf.mxu0
    %v748 = vadd.f32 %v314, %v747
    %v749 = vpop.f32.mrf.mxu0
    %v750 = vpop.f32.mrf.mxu0
    %v751 = vadd.f32 %v319, %v750
    %v752 = vpop.f32.mrf.mxu0
    %753 = vmatprep.mubr.bf16.mxu0 0
    %754 = vmatmul.mubr.bf16.gmra.mxu0 %v543
    %v755 = vpop.f32.mrf.mxu0
    %v756 = vadd.f32 %v324, %v755
    %v757 = vpop.f32.mrf.mxu0
    %v758 = vpop.f32.mrf.mxu0
    %v759 = vadd.f32 %v329, %v758
    %v760 = vpop.f32.mrf.mxu0
    %761 = vmatprep.mubr.bf16.mxu0 0
    %762 = vmatmul.mubr.bf16.gmra.mxu0 %v546
    %v763 = vpop.f32.mrf.mxu0
    %v764 = vadd.f32 %v334, %v763
    %v765 = vpop.f32.mrf.mxu0
    %v766 = vpop.f32.mrf.mxu0
    %v767 = vadd.f32 %v339, %v766
    %v768 = vpop.f32.mrf.mxu0
    %769 = vmatprep.mubr.bf16.mxu0 0
    %770 = vmatmul.mubr.bf16.gmra.mxu0 %v549
    %v771 = vpop.f32.mrf.mxu0
    %v772 = vadd.f32 %v344, %v771
    %v773 = vpop.f32.mrf.mxu0
    %v774 = vpop.f32.mrf.mxu0
    %v775 = vadd.f32 %v349, %v774
    %v776 = vpop.f32.mrf.mxu0
    %777 = vmatprep.mubr.bf16.mxu0 0
    %778 = vmatmul.mubr.bf16.gmra.mxu0 %v552
    %v779 = vpop.f32.mrf.mxu0
    %v780 = vadd.f32 %v354, %v779
    %v781 = vpop.f32.mrf.mxu0
    %v782 = vpop.f32.mrf.mxu0
    %v783 = vadd.f32 %v359, %v782
    %v784 = vpop.f32.mrf.mxu0
    %785 = vdwg.mxu0
    %v786 = vmax.f32 %v596, 0.0
    %v787 = vmax.f32 %v599, 0.0
    %v788 = vmax.f32 %v604, 0.0
    %v789 = vmax.f32 %v607, 0.0
    %v790 = vmax.f32 %v612, 0.0
    %v791 = vmax.f32 %v615, 0.0
    %v792 = vmax.f32 %v620, 0.0
    %v793 = vmax.f32 %v623, 0.0
    %v794 = vmax.f32 %v628, 0.0
    %v795 = vmax.f32 %v631, 0.0
    %v796 = vmax.f32 %v636, 0.0
    %v797 = vmax.f32 %v639, 0.0
    %v798 = vmax.f32 %v644, 0.0
    %v799 = vmax.f32 %v647, 0.0
    %v800 = vmax.f32 %v652, 0.0
    %v801 = vmax.f32 %v655, 0.0
    %v802 = vmax.f32 %v660, 0.0
    %v803 = vmax.f32 %v663, 0.0
    %v804 = vmax.f32 %v668, 0.0
    %v805 = vmax.f32 %v671, 0.0
    %v806 = vmax.f32 %v676, 0.0
    %v807 = vmax.f32 %v679, 0.0
    %v808 = vmax.f32 %v684, 0.0
    %v809 = vmax.f32 %v687, 0.0
    %v810 = vmax.f32 %v692, 0.0
    %v811 = vmax.f32 %v695, 0.0
    %v812 = vmax.f32 %v700, 0.0
    %v813 = vmax.f32 %v703, 0.0
    %v814 = vmax.f32 %v708, 0.0
    %v815 = vmax.f32 %v711, 0.0
    %v816 = vmax.f32 %v716, 0.0
    %v817 = vmax.f32 %v719, 0.0
    %v818 = vmax.f32 %v724, 0.0
    %v819 = vmax.f32 %v727, 0.0
    %v820 = vmax.f32 %v732, 0.0
    %v821 = vmax.f32 %v735, 0.0
    %v822 = vmax.f32 %v740, 0.0
    %v823 = vmax.f32 %v743, 0.0
    %v824 = vmax.f32 %v748, 0.0
    %v825 = vmax.f32 %v751, 0.0
    %v826 = vmax.f32 %v756, 0.0
    %v827 = vmax.f32 %v759, 0.0
    %v828 = vmax.f32 %v764, 0.0
    %v829 = vmax.f32 %v767, 0.0
    %v830 = vmax.f32 %v772, 0.0
    %v831 = vmax.f32 %v775, 0.0
    %v832 = vmax.f32 %v780, 0.0
    %v833 = vmax.f32 %v783, 0.0
    %v834 = vld [vmem:[%s3] sm:$0x3f]
    %v835 = vpack.c.bf16 %v787, %v786
    %v836 = vpack.c.bf16 %v789, %v788
    %v837 = vpack.c.bf16 %v791, %v790
    %v838 = vpack.c.bf16 %v793, %v792
    %v839 = vpack.c.bf16 %v795, %v794
    %v840 = vpack.c.bf16 %v797, %v796
    %v841 = vpack.c.bf16 %v799, %v798
    %v842 = vpack.c.bf16 %v801, %v800
    %v843 = vpack.c.bf16 %v803, %v802
    %v844 = vpack.c.bf16 %v805, %v804
    %v845 = vpack.c.bf16 %v807, %v806
    %v846 = vpack.c.bf16 %v809, %v808
    %v847 = vpack.c.bf16 %v811, %v810
    %v848 = vpack.c.bf16 %v813, %v812
    %v849 = vpack.c.bf16 %v815, %v814
    %v850 = vpack.c.bf16 %v817, %v816
    %v851 = vpack.c.bf16 %v819, %v818
    %v852 = vpack.c.bf16 %v821, %v820
    %v853 = vpack.c.bf16 %v823, %v822
    %v854 = vpack.c.bf16 %v825, %v824
    %v855 = vpack.c.bf16 %v827, %v826
    %v856 = vpack.c.bf16 %v829, %v828
    %v857 = vpack.c.bf16 %v831, %v830
    %v858 = vpack.c.bf16 %v833, %v832
    %v859 = vld [vmem:[%s4] sm:$0x7]
    %861 = vset.pattern.permute.xlu0 0
    %862 = vperm.xlu0 %861, %v859
    %v863 = vpop.permute.xlu0 %862
    %v866 = vcombine.high %v834, %v834
    %v868 = vunpack.c.l.s4 1983009808
    %v869 = vunpack.c.0.s8 %v868
    %v870 = vlaneseq
    %v871 = vshrl.u32 %v870, 7
    %v872 = vsub.s32 %v869, %v871
    %v873 = vrot.slane %v834, %v872
    %v875 = vunpack.c.l.s4 1983009808
    %v876 = vunpack.c.0.s8 %v875
    %v877 = vlaneseq
    %v878 = vshrl.u32 %v877, 7
    %v879 = vsub.s32 %v876, %v878
    %v880 = vrot.slane %v866, %v879
    %v881 = vcombine.high %v873, %v873
    %885 = vmatprep.subr.bf16.mxu0 0
    %886 = vmatpush1.bf16.msra.mxu0 %v842
    %887 = vmatprep.subr.bf16.mxu0 0
    %888 = vmatpush1.bf16.msra.mxu0 %v841
    %889 = vmatprep.subr.bf16.mxu0 0
    %890 = vmatpush1.bf16.msra.mxu0 %v840
    %891 = vmatprep.subr.bf16.mxu0 0
    %892 = vmatpush1.bf16.msra.mxu0 %v839
    %893 = vmatprep.subr.bf16.mxu0 0
    %894 = vmatpush1.bf16.msra.mxu0 %v838
    %895 = vmatprep.subr.bf16.mxu0 0
    %896 = vmatpush1.bf16.msra.mxu0 %v837
    %897 = vmatprep.subr.bf16.mxu0 0
    %898 = vmatpush1.bf16.msra.mxu0 %v836
    %899 = vmatprep.subr.bf16.mxu0 0
    %900 = vmatpush1.bf16.msra.mxu0 %v835
    %901 = vmatprep.subr.bf16.mxu0 0
    %902 = vmatpush2.bf16.msra.mxu0 %v850
    %903 = vmatprep.subr.bf16.mxu0 0
    %904 = vmatpush2.bf16.msra.mxu0 %v849
    %905 = vmatprep.subr.bf16.mxu0 0
    %906 = vmatpush2.bf16.msra.mxu0 %v848
    %907 = vmatprep.subr.bf16.mxu0 0
    %908 = vmatpush2.bf16.msra.mxu0 %v847
    %909 = vmatprep.subr.bf16.mxu0 0
    %910 = vmatpush2.bf16.msra.mxu0 %v846
    %911 = vmatprep.subr.bf16.mxu0 0
    %912 = vmatpush2.bf16.msra.mxu0 %v845
    %913 = vmatprep.subr.bf16.mxu0 0
    %914 = vmatpush2.bf16.msra.mxu0 %v844
    %915 = vmatprep.subr.bf16.mxu0 0
    %916 = vmatpush2.bf16.msra.mxu0 %v843
    %917 = vmatprep.mubr.bf16.mxu0 %v881
    %918 = vmatmul.mubr.bf16.gmra.mxu0 %v873
    %v919 = vpop.f32.mrf.mxu0
    %v920 = vadd.f32 %v863, %v919
    %v921 = vpop.f32.mrf.mxu0
    %v922 = vpop.f32.mrf.mxu0
    %v923 = vpop.f32.mrf.mxu0
    %924 = vdwg.mxu0
    %925 = vmatprep.subr.bf16.mxu0 0
    %926 = vmatpush1.bf16.msra.mxu0 %v858
    %927 = vmatprep.subr.bf16.mxu0 0
    %928 = vmatpush1.bf16.msra.mxu0 %v857
    %929 = vmatprep.subr.bf16.mxu0 0
    %930 = vmatpush1.bf16.msra.mxu0 %v856
    %931 = vmatprep.subr.bf16.mxu0 0
    %932 = vmatpush1.bf16.msra.mxu0 %v855
    %933 = vmatprep.subr.bf16.mxu0 0
    %934 = vmatpush1.bf16.msra.mxu0 %v854
    %935 = vmatprep.subr.bf16.mxu0 0
    %936 = vmatpush1.bf16.msra.mxu0 %v853
    %937 = vmatprep.subr.bf16.mxu0 0
    %938 = vmatpush1.bf16.msra.mxu0 %v852
    %939 = vmatprep.subr.bf16.mxu0 0
    %940 = vmatpush1.bf16.msra.mxu0 %v851
    %941 = vmatprep.subr.bf16.mxu0 0
    %942 = vmatpush2.bf16.msra.mxu0 0
    %943 = vmatprep.subr.bf16.mxu0 0
    %944 = vmatpush2.bf16.msra.mxu0 0
    %945 = vmatprep.subr.bf16.mxu0 0
    %946 = vmatpush2.bf16.msra.mxu0 0
    %947 = vmatprep.subr.bf16.mxu0 0
    %948 = vmatpush2.bf16.msra.mxu0 0
    %949 = vmatprep.subr.bf16.mxu0 0
    %950 = vmatpush2.bf16.msra.mxu0 0
    %951 = vmatprep.subr.bf16.mxu0 0
    %952 = vmatpush2.bf16.msra.mxu0 0
    %953 = vmatprep.subr.bf16.mxu0 0
    %954 = vmatpush2.bf16.msra.mxu0 0
    %955 = vmatprep.subr.bf16.mxu0 0
    %956 = vmatpush2.bf16.msra.mxu0 0
    %957 = vmatprep.mubr.bf16.mxu0 0
    %958 = vmatmul.mubr.bf16.gmra.mxu0 %v880
    %v959 = vpop.f32.mrf.mxu0
    %v960 = vadd.f32 %v920, %v959
    %v961 = vpop.f32.mrf.mxu0
    %v962 = vpop.f32.mrf.mxu0
    %v963 = vpop.f32.mrf.mxu0
    %964 = vdwg.mxu0
    %vm965 = vcmask 59392
    %966 = vst.msk [vmem:[#allocation2] sm:$0x7] %vm965, %v960
    // Predicated region
    $region22: #{mlp_forward.1} parent=1 // pred_check
      _
    $region23: #{mlp_forward.1} parent=1 // pred_check_branch
      %968 = sbr.rel (0) target = $region25
    $region24: #{mlp_forward.1} parent=1 // pred_region
      %s970 = ssub.s32 64, 64
      %971 = vsyncadd [#allocation3], %s970
      %s973 = sshll.u32 [#allocation2], 4
      %s974 = int_to_ptr.vmem [resolvable:$true] %s973
      %976 = dma.vmem_to_hbm [thread:$0]  %s974, 64, %s5, [#allocation3]
    $region25: #{mlp_forward.1} parent=1 // pred_fallthru
      _
    // Predicated region
    $region26: #{mlp_forward.1} parent=1 // pred_check
      _
    $region27: #{mlp_forward.1} parent=1 // pred_check_branch
      %978 = sbr.rel (0) target = $region29
    $region28: #{mlp_forward.1} parent=1 // pred_region
      %979 = dma.done [#allocation3], 64
    $region29: #{mlp_forward.1} parent=1 // pred_fallthru
      _
    %980 = vsyncpa [#allocation3], 1

</llo_original>
